<compile_context>
chip_gen: v7x
topology: tpu7x:2x2x1
jax: 0.10.0
libtpu: 0.0.40
codegen_flags: <defaults>
</compile_context>

<pallas_src>
import jax
import jax.numpy as jnp
from jax import lax
from jax.experimental import pallas as pl
from jax.experimental.pallas import tpu as pltpu


def _round_up(a, b):
    return (a + b - 1) // b * b


def _vmem_capacity_bytes():
    try:
        return int(pltpu.get_tpu_info().vmem_capacity_bytes)
    except Exception:
        return 64 * 1024 * 1024  # conservative default: v7x per-TensorCore VMEM


def _vmem_need(tn, tv, H, x_bytes, w_bytes, n_streams, bias_any, share_x):
    """Estimate peak VMEM for one (TN, TV) tile configuration."""
    n_x = 1 if (share_x or n_streams == 1) else n_streams
    need = 2 * tn * H * x_bytes * n_x            # double-buffered activation tile(s)
    need += 2 * tv * H * w_bytes * n_streams     # double-buffered weight tile(s)
    if bias_any:
        need += 2 * tv * 4 * n_streams           # double-buffered bias rows
    # (TN, 1) vectors pad to 128 lanes in VMEM: ids (2 bufs) + per-stream output
    # (2 bufs) + 3 single-buffered scratch accumulators per stream.
    vec = _round_up(tn, 8) * 128 * 4
    need += vec * (2 + 5 * n_streams)
    # In-kernel (TN, TV) f32 logits tile + elementwise temporaries (where/exp);
    # the fused streams run sequentially in the body so temporaries are reused.
    need += 3 * tn * tv * 4
    return need


def _choose_tiles(N, H, V, x_bytes, w_bytes, *, n_streams=1, bias_any=False,
                  share_x=True):
    """Pick (TN, TV, vmem_limit_bytes).

    Objective: (1) minimize weight HBM re-streams ceil(N/TN) -- ideally 1, i.e.
    all tokens resident; (2) then maximize TV (fewer grid steps); (3) then TN.
    """
    cap = _vmem_capacity_bytes()
    budget = int(cap * 0.55)                     # headroom for compiler scratch
    v_ceil = _round_up(V, 128)
    n_ceil = _round_up(max(N, 8), 8)
    # v7x exposes ~64 MiB VMEM per TensorCore (v5e/v6e: 128 MiB, single TC).
    # On v7x keep >= 2 token tiles so the "parallel" token axis shards across both
    # TensorCores; the extra weight stream is absorbed by its ~3.2 TB/s HBM.
    min_token_tiles = 2 if (cap <= 96 * 1024 * 1024 and n_ceil >= 256) else 1
    n_target = _round_up(pl.cdiv(n_ceil, min_token_tiles), 8)
    if n_target >= 128:
        n_target = _round_up(n_target, 128)      # MXU-aligned token tiles
    tn_cands = sorted(
        {c for c in (n_target, 8192, 4096, 2048, 1024, 512, 256, 128, 64, 32, 16, 8)
         if 8 <= c <= n_target}, reverse=True)
    tv_cands = [c for c in (2048, 1024, 512, 256, 128) if c <= v_ceil] or [128]

    best = None
    for tn in tn_cands:
        for tv in tv_cands:
            need = _vmem_need(tn, tv, H, x_bytes, w_bytes, n_streams, bias_any,
                              share_x)
            if need > budget:
                continue
            score = (-pl.cdiv(n_ceil, tn), tv, tn)
            if best is None or score > best[0]:
                best = (score, tn, tv, need)
    if best is None:
        # Extremely tight VMEM; fall back to the smallest legal tiles.
        tn, tv = tn_cands[-1], tv_cands[-1]
        need = _vmem_need(tn, tv, H, x_bytes, w_bytes, n_streams, bias_any, share_x)
    else:
        _, tn, tv, need = best

    cap90 = int(cap * 0.9)                       # never ask Mosaic for ~all of VMEM
    vmem_limit = min(cap90, max(int(need * 1.3), 32 * 1024 * 1024, need + (4 << 20)))
    return tn, tv, int(vmem_limit)


def _make_logp_kernel(*, inv_temperature, v_actual, tv, has_bias, mask_tail,
                      fuse_ref=False, ref_has_bias=False, share_x=True):
    """Kernel over one (TN token, TV vocab) tile: online logsumexp + token gather.

    When fuse_ref, the reference-model pass shares the same grid (and, when
    share_x, the same activation tile), with its own accumulators and output.
    """

    def kernel(*refs):
        idx = 0
        x_ref = refs[idx]; idx += 1
        w_ref = refs[idx]; idx += 1
        b_ref = None
        if has_bias:
            b_ref = refs[idx]; idx += 1
        rx_ref = rw_ref = rb_ref = None
        if fuse_ref:
            if share_x:
                rx_ref = x_ref
            else:
                rx_ref = refs[idx]; idx += 1
            rw_ref = refs[idx]; idx += 1
            if ref_has_bias:
                rb_ref = refs[idx]; idx += 1
        ids_ref = refs[idx]; idx += 1
        out_ref = refs[idx]; idx += 1
        rout_ref = None
        if fuse_ref:
            rout_ref = refs[idx]; idx += 1
        m_sc, l_sc, s_sc = refs[idx:idx + 3]; idx += 3
        if fuse_ref:
            rm_sc, rl_sc, rs_sc = refs[idx:idx + 3]; idx += 3

        j = pl.program_id(1)

        # (1, TV) lane index compared against (TN, 1) local ids -- no full-tile
        # int32 iota materialized.  Ids outside this tile (or ignore_index values
        # outside [0, V)) simply never match; such rows degenerate to -logsumexp
        # and are masked downstream by the attention mask.
        lane = lax.broadcasted_iota(jnp.int32, (1, tv), 1)
        ids_local = ids_ref[...] - j * tv                  # (TN, 1)
        hit = lane == ids_local                            # broadcast -> (TN, TV)
        valid = (lane < (v_actual - j * tv)) if mask_tail else None

        def stream(xr, wr, br, m, l, s):
            @pl.when(j == 0)
            def _():
                m[...] = jnp.full_like(m, -jnp.inf)
                l[...] = jnp.zeros_like(l)
                s[...] = jnp.zeros_like(s)

            # (TN, TV) logits tile: contract x (TN, H) with W (TV, H) over H on
            # the MXU, accumulating in f32 (weight keeps its (V, H) HBM layout).
            # TODO(synk): verify in the Mosaic bundle dump that this ((1),(1))
            # contraction emits no per-tile vxpose; if it does, pre-relayout W.
            logits = lax.dot_general(
                xr[...], wr[...],
                dimension_numbers=(((1,), (1,)), ((), ())),
                preferred_element_type=jnp.float32)
            if br is not None:
                logits = logits + br[...].astype(jnp.float32)
            if inv_temperature != 1.0:
                logits = logits * inv_temperature
            if valid is not None:
                # INVARIANT: mask padded vocab columns BEFORE max/exp/gather so
                # stale DMA-buffer data cannot pollute the logsumexp (jnp.where
                # selects -1e30 even against NaN garbage).
                logits = jnp.where(valid, logits, -1e30)

            # Fused gather of the selected token's logit.
            # TODO(synk): for small H, scalar-prefetch ids and row-gather W[ids]
            # once per token tile to drop this full-tile select + XLU reduce.
            s[...] += jnp.sum(jnp.where(hit, logits, 0.0), axis=-1, keepdims=True)

            # Online logsumexp over the vocab axis.
            m_new = jnp.maximum(m[...], jnp.max(logits, axis=-1, keepdims=True))
            l[...] = l[...] * jnp.exp(m[...] - m_new) + jnp.sum(
                jnp.exp(logits - m_new), axis=-1, keepdims=True)
            m[...] = m_new

        stream(x_ref, w_ref, b_ref, m_sc, l_sc, s_sc)
        if fuse_ref:
            stream(rx_ref, rw_ref, rb_ref, rm_sc, rl_sc, rs_sc)

        @pl.when(j == pl.num_programs(1) - 1)
        def _():
            # log_softmax(logits)[n, ids[n]] = selected_logit - logsumexp
            out_ref[...] = s_sc[...] - (m_sc[...] + jnp.log(l_sc[...]))
            if fuse_ref:
                rout_ref[...] = rs_sc[...] - (rm_sc[...] + jnp.log(rl_sc[...]))

    return kernel


def fused_linear_logp(x2d, weight_vh, bias_v, ids, temperature=1.0,
                      ref_x2d=None, ref_weight_vh=None, ref_bias_v=None):
    """per_token_logps[n] = log_softmax((x2d[n] @ W.T + b) / T)[ids[n]]  (float32).

    x2d: (N, H); weight_vh: (V, H) (PyTorch Linear layout); bias_v: (V,) or None.
    If ref_weight_vh is given, a reference-model pass is fused into the same
    pallas_call (sharing the activation tile when ref_x2d is None) and a pair
    (policy_logps, ref_logps) is returned.
    """
    N, H = x2d.shape
    V, Hw = weight_vh.shape
    assert Hw == H, "weight must be (V, H)"
    has_bias = bias_v is not None
    fuse_ref = ref_weight_vh is not None
    ref_has_bias = fuse_ref and (ref_bias_v is not None)
    share_x = fuse_ref and (ref_x2d is None)
    n_streams = 2 if fuse_ref else 1

    x_bytes = jnp.dtype(x2d.dtype).itemsize
    w_bytes = jnp.dtype(weight_vh.dtype).itemsize
    if fuse_ref:
        w_bytes = max(w_bytes, jnp.dtype(ref_weight_vh.dtype).itemsize)

    tn, tv, vmem_limit = _choose_tiles(
        N, H, V, x_bytes, w_bytes, n_streams=n_streams,
        bias_any=has_bias or ref_has_bias, share_x=share_x)

    ids2d = ids.reshape(N, 1).astype(jnp.int32)

    # Only pad the (cheap) token axis when N is smaller than one tile; at scale
    # partial edge blocks are handled by Pallas and we avoid copying x.
    Nk = N
    if N < tn:
        pad = tn - N
        x2d = jnp.pad(x2d, ((0, pad), (0, 0)))
        ids2d = jnp.pad(ids2d, ((0, pad), (0, 0)))
        if fuse_ref and not share_x:
            ref_x2d = jnp.pad(ref_x2d, ((0, pad), (0, 0)))
        Nk = tn

    grid = (pl.cdiv(Nk, tn), pl.cdiv(V, tv))
    mask_tail = (V % tv) != 0

    x_spec = pl.BlockSpec((tn, H), lambda i, j: (i, 0))
    w_spec = pl.BlockSpec((tv, H), lambda i, j: (j, 0))
    b_spec = pl.BlockSpec((1, tv), lambda i, j: (0, j))
    vec_spec = pl.BlockSpec((tn, 1), lambda i, j: (i, 0))

    in_specs, args = [x_spec, w_spec], [x2d, weight_vh]
    if has_bias:
        in_specs.append(b_spec)
        args.append(bias_v.reshape(1, V))
    if fuse_ref:
        if not share_x:
            in_specs.append(x_spec)
            args.append(ref_x2d)
        in_specs.append(w_spec)
        args.append(ref_weight_vh)
        if ref_has_bias:
            in_specs.append(b_spec)
            args.append(ref_bias_v.reshape(1, V))
    in_specs.append(vec_spec)
    args.append(ids2d)

    kernel = _make_logp_kernel(
        inv_temperature=1.0 / float(temperature), v_actual=V, tv=tv,
        has_bias=has_bias, mask_tail=mask_tail, fuse_ref=fuse_ref,
        ref_has_bias=ref_has_bias, share_x=share_x)

    if fuse_ref:
        out_shape = (jax.ShapeDtypeStruct((Nk, 1), jnp.float32),
                     jax.ShapeDtypeStruct((Nk, 1), jnp.float32))
        out_specs = [vec_spec, vec_spec]
    else:
        out_shape = jax.ShapeDtypeStruct((Nk, 1), jnp.float32)
        out_specs = vec_spec

    scratch = [pltpu.VMEM((tn, 1), jnp.float32)] * (3 * n_streams)

    out = pl.pallas_call(
        kernel,
        out_shape=out_shape,
        grid_spec=pltpu.PrefetchScalarGridSpec(
            num_scalar_prefetch=0,
            grid=grid,
            in_specs=in_specs,
            out_specs=out_specs,
            scratch_shapes=scratch),
        compiler_params=pltpu.CompilerParams(
            dimension_semantics=("parallel", "arbitrary"),
            vmem_limit_bytes=vmem_limit),
    )(*args)

    if fuse_ref:
        return out[0][:N, 0], out[1][:N, 0]
    return out[:N, 0]


def liger_lm_head_grpo_forward(
    x, selected_token_ids, attention_mask, advantages,
    lin_weight, ref_weight, lin_bias=None, ref_bias=None,
    ref_per_token_logps=None, old_per_token_logps=None, ref_input=None,
    beta=0.1, epsilon_low=0.2, epsilon_high=0.2, temperature=1.0,
    use_ref_model=True, loss_type="bnpo", max_completion_length=None,
):
    """Mirrors LigerFusedLinearGRPOLoss forward: returns (loss, metrics)."""
    B, T, H = x.shape
    N = B * T
    ids = selected_token_ids.reshape(N)
    x2d = x.reshape(N, H)

    need_ref_pass = (use_ref_model and beta != 0.0 and ref_per_token_logps is None)
    if need_ref_pass:
        # Fused policy + reference pass: one grid, one (shared-when-possible)
        # activation stream, two interleaved weight streams.
        ref_x2d = None if ref_input is None else ref_input.reshape(N, H)
        ptl, rtl = fused_linear_logp(
            x2d, lin_weight, lin_bias, ids, temperature,
            ref_x2d=ref_x2d, ref_weight_vh=ref_weight, ref_bias_v=ref_bias)
        per_token_logps = ptl.reshape(B, T)
        ref_per_token_logps = rtl.reshape(B, T)
    else:
        per_token_logps = fused_linear_logp(
            x2d, lin_weight, lin_bias, ids, temperature).reshape(B, T)

    kl = None
    if use_ref_model and beta != 0.0:
        d = ref_per_token_logps - per_token_logps
        kl = jnp.exp(d) - d - 1.0

    old = per_token_logps if old_per_token_logps is None else old_per_token_logps
    coef_1 = jnp.exp(per_token_logps - old)
    coef_2 = jnp.clip(coef_1, 1.0 - epsilon_low, 1.0 + epsilon_high)
    adv = advantages.astype(jnp.float32)[:, None]
    per_token_loss = -jnp.minimum(coef_1 * adv, coef_2 * adv)
    if beta != 0.0:
        per_token_loss = per_token_loss + beta * kl

    # NaN-safe masking: zero masked positions with `where` BEFORE reducing, so
    # inf/NaN from externally supplied logps at ignore_index positions cannot
    # poison the sums (inf * 0 = nan under plain mask multiplication).
    mask = attention_mask.astype(jnp.float32)
    mask_bool = attention_mask > 0
    masked_loss = jnp.where(mask_bool, per_token_loss, 0.0)
    denom = jnp.maximum(mask.sum(), 1.0)
    if loss_type == "grpo":
        loss = (masked_loss.sum(-1) / jnp.maximum(mask.sum(-1), 1.0)).sum() / B
    elif loss_type == "bnpo":
        loss = masked_loss.sum() / denom
    elif loss_type == "dr_grpo":
        if max_completion_length is None:
            raise ValueError("max_completion_length required for dr_grpo")
        loss = masked_loss.sum() / (B * max_completion_length)
    else:
        raise ValueError(f"unknown loss_type {loss_type}")

    metrics = []
    if beta != 0.0:
        metrics.append(jnp.where(mask_bool, kl, 0.0).sum() / denom)
    is_clipped = ((coef_1 < 1.0 - epsilon_low) & (adv < 0)) | \
                 ((coef_1 > 1.0 + epsilon_high) & (adv > 0))
    metrics.append(jnp.where(mask_bool, is_clipped, False)
                   .astype(jnp.float32).sum() / denom)
    return loss, tuple(metrics)


def _reference_logp(x2d, weight_vh, bias_v, ids, temperature):
    logits = x2d.astype(jnp.float32) @ weight_vh.astype(jnp.float32).T
    if bias_v is not None:
        logits = logits + bias_v.astype(jnp.float32)
    logits = logits / temperature
    logp = jax.nn.log_softmax(logits, axis=-1)
    return jnp.take_along_axis(logp, ids[:, None], axis=-1)[:, 0]


if __name__ == "__main__":
    key = jax.random.PRNGKey(0)
    ks = jax.random.split(key, 10)

    B, T, H, V = 2, 8, 32, 256
    dtype = jnp.float32
    beta, eps_lo, eps_hi, temperature = 0.1, 0.2, 0.2, 1.0

    x = jax.random.normal(ks[0], (B, T, H), dtype) * 0.5
    ref_input = jax.random.normal(ks[1], (B, T, H), dtype) * 0.5
    # torch.nn.Linear(H, V, bias=False) weights: shape (V, H).
    lin_weight = jax.random.normal(ks[2], (V, H), dtype) / jnp.sqrt(H)
    ref_weight = jax.random.normal(ks[3], (V, H), dtype) / jnp.sqrt(H)
    selected_token_ids = jax.random.randint(ks[4], (B, T), 0, V, dtype=jnp.int32)
    attention_mask = jnp.ones((B, T), jnp.int32).at[:, -2:].set(0)
    advantages = jax.random.normal(ks[5], (B,), jnp.float32)

    loss, metrics = liger_lm_head_grpo_forward(
        x, selected_token_ids, attention_mask, advantages,
        lin_weight, ref_weight, ref_input=ref_input,
        beta=beta, epsilon_low=eps_lo, epsilon_high=eps_hi,
        temperature=temperature, use_ref_model=True, loss_type="bnpo")
    jax.block_until_ready((loss, metrics))
    assert jnp.isfinite(loss) and all(jnp.isfinite(m) for m in metrics)

    N = B * T
    ids_flat = selected_token_ids.reshape(N)
    x_flat = x.reshape(N, H)

    # Check 1: f32, no bias, vocab a multiple of the tile width.
    got = fused_linear_logp(x_flat, lin_weight, None, ids_flat, temperature)
    want = _reference_logp(x_flat, lin_weight, None, ids_flat, temperature)
    assert jnp.allclose(got, want, atol=1e-4, rtol=1e-4), "f32 per-token logp mismatch"

    # Check 2: bias present + vocab not a multiple of 128 (exercises the tail mask).
    V2 = 200
    w2 = jax.random.normal(ks[6], (V2, H), dtype) / jnp.sqrt(H)
    b2 = jax.random.normal(ks[7], (V2,), dtype) * 0.1
    ids2 = jax.random.randint(ks[8], (N,), 0, V2, dtype=jnp.int32)
    got2 = fused_linear_logp(x_flat, w2, b2, ids2, temperature=1.3)
    want2 = _reference_logp(x_flat, w2, b2, ids2, temperature=1.3)
    assert jnp.allclose(got2, want2, atol=1e-4, rtol=1e-4), "bias/tail logp mismatch"

    # Check 3: bf16 activations + weights stream through unchanged (f32 accumulation).
    xb = x_flat.astype(jnp.bfloat16)
    wb = lin_weight.astype(jnp.bfloat16)
    got3 = fused_linear_logp(xb, wb, None, ids_flat, temperature)
    want3 = _reference_logp(xb.astype(jnp.float32), wb.astype(jnp.float32),
                            None, ids_flat, temperature)
    assert jnp.allclose(got3, want3, atol=2e-2, rtol=2e-2), "bf16 logp mismatch"

    # Check 4: fused policy + reference pass with separate reference activations.
    got_p, got_r = fused_linear_logp(
        x_flat, lin_weight, None, ids_flat, temperature,
        ref_x2d=ref_input.reshape(N, H), ref_weight_vh=ref_weight)
    want_r = _reference_logp(ref_input.reshape(N, H), ref_weight, None,
                             ids_flat, temperature)
    assert jnp.allclose(got_p, want, atol=1e-4, rtol=1e-4), "fused policy logp mismatch"
    assert jnp.allclose(got_r, want_r, atol=1e-4, rtol=1e-4), "fused ref logp mismatch"

    # Check 5: fused pass sharing the activation tile (ref_input=None path).
    got_p2, got_r2 = fused_linear_logp(
        x_flat, lin_weight, None, ids_flat, temperature, ref_weight_vh=ref_weight)
    want_r2 = _reference_logp(x_flat, ref_weight, None, ids_flat, temperature)
    assert jnp.allclose(got_p2, want, atol=1e-4, rtol=1e-4), "shared-x policy mismatch"
    assert jnp.allclose(got_r2, want_r2, atol=1e-4, rtol=1e-4), "shared-x ref mismatch"

    print("KERNEL_OK")
</pallas_src>

<mosaic_0001>
module attributes {stable_mosaic.version = 11 : i64} {
  func.func @kernel(%arg0: i32, %arg1: i32, %arg2: memref<16x32xf32, #tpu.memory_space<vmem>>, %arg3: memref<256x32xf32, #tpu.memory_space<vmem>>, %arg4: memref<16x32xf32, #tpu.memory_space<vmem>>, %arg5: memref<256x32xf32, #tpu.memory_space<vmem>>, %arg6: memref<16x1xi32, #tpu.memory_space<vmem>>, %arg7: memref<16x1xf32, #tpu.memory_space<vmem>>, %arg8: memref<16x1xf32, #tpu.memory_space<vmem>>, %arg9: memref<16x1xf32, #tpu.memory_space<vmem>>, %arg10: memref<16x1xf32, #tpu.memory_space<vmem>>, %arg11: memref<16x1xf32, #tpu.memory_space<vmem>>, %arg12: memref<16x1xf32, #tpu.memory_space<vmem>>, %arg13: memref<16x1xf32, #tpu.memory_space<vmem>>, %arg14: memref<16x1xf32, #tpu.memory_space<vmem>>) attributes {dimension_semantics = [#tpu.dimension_semantics<parallel>, #tpu.dimension_semantics<arbitrary>], iteration_bounds = array<i64: 1, 1>, scalar_prefetch = 0 : i64, scratch_operands = 6 : i64, tpu.core_type = #tpu.core_type<tc>, window_params = [{transform_indices = @transform_0, window_bounds = array<i64: 16, 32>}, {transform_indices = @transform_1, window_bounds = array<i64: 256, 32>}, {transform_indices = @transform_2, window_bounds = array<i64: 16, 32>}, {transform_indices = @transform_3, window_bounds = array<i64: 256, 32>}, {transform_indices = @transform_4, window_bounds = array<i64: 16, 1>}, {transform_indices = @transform_5, window_bounds = array<i64: 16, 1>}, {transform_indices = @transform_6, window_bounds = array<i64: 16, 1>}]} {
    %0 = tpu.iota {dimensions = array<i32: 1>} : vector<1x256xi32>
    %c0 = arith.constant 0 : index
    %c0_0 = arith.constant 0 : index
    %1 = vector.load %arg6[%c0, %c0_0] : memref<16x1xi32, #tpu.memory_space<vmem>>, vector<16x1xi32>
    %c256_i32 = arith.constant 256 : i32
    %2 = arith.muli %arg1, %c256_i32 : i32
    %3 = vector.broadcast %2 : i32 to vector<16x1xi32>
    %4 = arith.subi %1, %3 : vector<16x1xi32>
    %5 = vector.broadcast %0 : vector<1x256xi32> to vector<16x256xi32>
    %6 = vector.broadcast %4 : vector<16x1xi32> to vector<16x256xi32>
    %7 = arith.cmpi eq, %5, %6 : vector<16x256xi32>
    %c0_i32 = arith.constant 0 : i32
    %8 = arith.cmpi eq, %arg1, %c0_i32 : i32
    %9 = arith.extui %8 : i1 to i32
    %c0_i32_1 = arith.constant 0 : i32
    %10 = arith.cmpi ne, %9, %c0_i32_1 : i32
    scf.if %10 {
      %cst_51 = arith.constant 0xFF800000 : f32
      %71 = vector.broadcast %cst_51 : f32 to vector<16x1xf32>
      %c0_52 = arith.constant 0 : index
      %c0_53 = arith.constant 0 : index
      %72 = vector.load %arg9[%c0_52, %c0_53] : memref<16x1xf32, #tpu.memory_space<vmem>>, vector<16x1xf32>
      tpu.vector_store %arg9[%c0_52, %c0_53], %71 {strides = array<i32>} : memref<16x1xf32, #tpu.memory_space<vmem>>, vector<16x1xf32>,
      %cst_54 = arith.constant 0.000000e+00 : f32
      %73 = vector.broadcast %cst_54 : f32 to vector<16x1xf32>
      %c0_55 = arith.constant 0 : index
      %c0_56 = arith.constant 0 : index
      %74 = vector.load %arg10[%c0_55, %c0_56] : memref<16x1xf32, #tpu.memory_space<vmem>>, vector<16x1xf32>
      tpu.vector_store %arg10[%c0_55, %c0_56], %73 {strides = array<i32>} : memref<16x1xf32, #tpu.memory_space<vmem>>, vector<16x1xf32>,
      %cst_57 = arith.constant 0.000000e+00 : f32
      %75 = vector.broadcast %cst_57 : f32 to vector<16x1xf32>
      %c0_58 = arith.constant 0 : index
      %c0_59 = arith.constant 0 : index
      %76 = vector.load %arg11[%c0_58, %c0_59] : memref<16x1xf32, #tpu.memory_space<vmem>>, vector<16x1xf32>
      tpu.vector_store %arg11[%c0_58, %c0_59], %75 {strides = array<i32>} : memref<16x1xf32, #tpu.memory_space<vmem>>, vector<16x1xf32>,
    } else {
    }
    %c0_2 = arith.constant 0 : index
    %c0_3 = arith.constant 0 : index
    %11 = vector.load %arg2[%c0_2, %c0_3] : memref<16x32xf32, #tpu.memory_space<vmem>>, vector<16x32xf32>
    %c0_4 = arith.constant 0 : index
    %c0_5 = arith.constant 0 : index
    %12 = vector.load %arg3[%c0_4, %c0_5] : memref<256x32xf32, #tpu.memory_space<vmem>>, vector<256x32xf32>
    %cst = arith.constant dense<0.000000e+00> : vector<16x256xf32>
    %13 = tpu.matmul %11, %12, %cst {dimension_numbers = #tpu.dot_dimension_numbers<[1], [1], [0], [0], [0, 0, 1, 0], [], []>} : vector<16x32xf32>, vector<256x32xf32>, vector<16x256xf32> -> vector<16x256xf32>
    %c0_6 = arith.constant 0 : index
    %c0_7 = arith.constant 0 : index
    %14 = vector.load %arg11[%c0_6, %c0_7] : memref<16x1xf32, #tpu.memory_space<vmem>>, vector<16x1xf32>
    %cst_8 = arith.constant 0.000000e+00 : f32
    %15 = vector.broadcast %cst_8 : f32 to vector<16x256xf32>
    %16 = arith.select %7, %13, %15 : vector<16x256xi1>, vector<16x256xf32>
    %cst_9 = arith.constant dense<0.000000e+00> : vector<16xf32>
    %17 = vector.multi_reduction <add>, %16, %cst_9 [1] : vector<16x256xf32> to vector<16xf32>
    %18 = vector.shape_cast %17 : vector<16xf32> to vector<16x1xf32>
    %19 = arith.addf %14, %18 : vector<16x1xf32>
    %c0_10 = arith.constant 0 : index
    %c0_11 = arith.constant 0 : index
    %20 = vector.load %arg11[%c0_10, %c0_11] : memref<16x1xf32, #tpu.memory_space<vmem>>, vector<16x1xf32>
    tpu.vector_store %arg11[%c0_10, %c0_11], %19 {strides = array<i32>} : memref<16x1xf32, #tpu.memory_space<vmem>>, vector<16x1xf32>,
    %c0_12 = arith.constant 0 : index
    %c0_13 = arith.constant 0 : index
    %21 = vector.load %arg9[%c0_12, %c0_13] : memref<16x1xf32, #tpu.memory_space<vmem>>, vector<16x1xf32>
    %cst_14 = arith.constant dense<0xFF800000> : vector<16xf32>
    %22 = vector.multi_reduction <maximumf>, %13, %cst_14 [1] : vector<16x256xf32> to vector<16xf32>
    %23 = vector.shape_cast %22 : vector<16xf32> to vector<16x1xf32>
    %24 = arith.maximumf %21, %23 : vector<16x1xf32>
    %c0_15 = arith.constant 0 : index
    %c0_16 = arith.constant 0 : index
    %25 = vector.load %arg10[%c0_15, %c0_16] : memref<16x1xf32, #tpu.memory_space<vmem>>, vector<16x1xf32>
    %c0_17 = arith.constant 0 : index
    %c0_18 = arith.constant 0 : index
    %26 = vector.load %arg9[%c0_17, %c0_18] : memref<16x1xf32, #tpu.memory_space<vmem>>, vector<16x1xf32>
    %27 = arith.subf %26, %24 : vector<16x1xf32>
    %28 = math.exp %27 : vector<16x1xf32>
    %29 = arith.mulf %25, %28 : vector<16x1xf32>
    %30 = vector.broadcast %24 : vector<16x1xf32> to vector<16x256xf32>
    %31 = arith.subf %13, %30 : vector<16x256xf32>
    %32 = math.exp %31 : vector<16x256xf32>
    %cst_19 = arith.constant dense<0.000000e+00> : vector<16xf32>
    %33 = vector.multi_reduction <add>, %32, %cst_19 [1] : vector<16x256xf32> to vector<16xf32>
    %34 = vector.shape_cast %33 : vector<16xf32> to vector<16x1xf32>
    %35 = arith.addf %29, %34 : vector<16x1xf32>
    %c0_20 = arith.constant 0 : index
    %c0_21 = arith.constant 0 : index
    %36 = vector.load %arg10[%c0_20, %c0_21] : memref<16x1xf32, #tpu.memory_space<vmem>>, vector<16x1xf32>
    tpu.vector_store %arg10[%c0_20, %c0_21], %35 {strides = array<i32>} : memref<16x1xf32, #tpu.memory_space<vmem>>, vector<16x1xf32>,
    %c0_22 = arith.constant 0 : index
    %c0_23 = arith.constant 0 : index
    %37 = vector.load %arg9[%c0_22, %c0_23] : memref<16x1xf32, #tpu.memory_space<vmem>>, vector<16x1xf32>
    tpu.vector_store %arg9[%c0_22, %c0_23], %24 {strides = array<i32>} : memref<16x1xf32, #tpu.memory_space<vmem>>, vector<16x1xf32>,
    %c0_i32_24 = arith.constant 0 : i32
    %38 = arith.cmpi eq, %arg1, %c0_i32_24 : i32
    %39 = arith.extui %38 : i1 to i32
    %c0_i32_25 = arith.constant 0 : i32
    %40 = arith.cmpi ne, %39, %c0_i32_25 : i32
    scf.if %40 {
      %cst_51 = arith.constant 0xFF800000 : f32
      %71 = vector.broadcast %cst_51 : f32 to vector<16x1xf32>
      %c0_52 = arith.constant 0 : index
      %c0_53 = arith.constant 0 : index
      %72 = vector.load %arg12[%c0_52, %c0_53] : memref<16x1xf32, #tpu.memory_space<vmem>>, vector<16x1xf32>
      tpu.vector_store %arg12[%c0_52, %c0_53], %71 {strides = array<i32>} : memref<16x1xf32, #tpu.memory_space<vmem>>, vector<16x1xf32>,
      %cst_54 = arith.constant 0.000000e+00 : f32
      %73 = vector.broadcast %cst_54 : f32 to vector<16x1xf32>
      %c0_55 = arith.constant 0 : index
      %c0_56 = arith.constant 0 : index
      %74 = vector.load %arg13[%c0_55, %c0_56] : memref<16x1xf32, #tpu.memory_space<vmem>>, vector<16x1xf32>
      tpu.vector_store %arg13[%c0_55, %c0_56], %73 {strides = array<i32>} : memref<16x1xf32, #tpu.memory_space<vmem>>, vector<16x1xf32>,
      %cst_57 = arith.constant 0.000000e+00 : f32
      %75 = vector.broadcast %cst_57 : f32 to vector<16x1xf32>
      %c0_58 = arith.constant 0 : index
      %c0_59 = arith.constant 0 : index
      %76 = vector.load %arg14[%c0_58, %c0_59] : memref<16x1xf32, #tpu.memory_space<vmem>>, vector<16x1xf32>
      tpu.vector_store %arg14[%c0_58, %c0_59], %75 {strides = array<i32>} : memref<16x1xf32, #tpu.memory_space<vmem>>, vector<16x1xf32>,
    } else {
    }
    %c0_26 = arith.constant 0 : index
    %c0_27 = arith.constant 0 : index
    %41 = vector.load %arg4[%c0_26, %c0_27] : memref<16x32xf32, #tpu.memory_space<vmem>>, vector<16x32xf32>
    %c0_28 = arith.constant 0 : index
    %c0_29 = arith.constant 0 : index
    %42 = vector.load %arg5[%c0_28, %c0_29] : memref<256x32xf32, #tpu.memory_space<vmem>>, vector<256x32xf32>
    %cst_30 = arith.constant dense<0.000000e+00> : vector<16x256xf32>
    %43 = tpu.matmul %41, %42, %cst_30 {dimension_numbers = #tpu.dot_dimension_numbers<[1], [1], [0], [0], [0, 0, 1, 0], [], []>} : vector<16x32xf32>, vector<256x32xf32>, vector<16x256xf32> -> vector<16x256xf32>
    %c0_31 = arith.constant 0 : index
    %c0_32 = arith.constant 0 : index
    %44 = vector.load %arg14[%c0_31, %c0_32] : memref<16x1xf32, #tpu.memory_space<vmem>>, vector<16x1xf32>
    %cst_33 = arith.constant 0.000000e+00 : f32
    %45 = vector.broadcast %cst_33 : f32 to vector<16x256xf32>
    %46 = arith.select %7, %43, %45 : vector<16x256xi1>, vector<16x256xf32>
    %cst_34 = arith.constant dense<0.000000e+00> : vector<16xf32>
    %47 = vector.multi_reduction <add>, %46, %cst_34 [1] : vector<16x256xf32> to vector<16xf32>
    %48 = vector.shape_cast %47 : vector<16xf32> to vector<16x1xf32>
    %49 = arith.addf %44, %48 : vector<16x1xf32>
    %c0_35 = arith.constant 0 : index
    %c0_36 = arith.constant 0 : index
    %50 = vector.load %arg14[%c0_35, %c0_36] : memref<16x1xf32, #tpu.memory_space<vmem>>, vector<16x1xf32>
    tpu.vector_store %arg14[%c0_35, %c0_36], %49 {strides = array<i32>} : memref<16x1xf32, #tpu.memory_space<vmem>>, vector<16x1xf32>,
    %c0_37 = arith.constant 0 : index
    %c0_38 = arith.constant 0 : index
    %51 = vector.load %arg12[%c0_37, %c0_38] : memref<16x1xf32, #tpu.memory_space<vmem>>, vector<16x1xf32>
    %cst_39 = arith.constant dense<0xFF800000> : vector<16xf32>
    %52 = vector.multi_reduction <maximumf>, %43, %cst_39 [1] : vector<16x256xf32> to vector<16xf32>
    %53 = vector.shape_cast %52 : vector<16xf32> to vector<16x1xf32>
    %54 = arith.maximumf %51, %53 : vector<16x1xf32>
    %c0_40 = arith.constant 0 : index
    %c0_41 = arith.constant 0 : index
    %55 = vector.load %arg13[%c0_40, %c0_41] : memref<16x1xf32, #tpu.memory_space<vmem>>, vector<16x1xf32>
    %c0_42 = arith.constant 0 : index
    %c0_43 = arith.constant 0 : index
    %56 = vector.load %arg12[%c0_42, %c0_43] : memref<16x1xf32, #tpu.memory_space<vmem>>, vector<16x1xf32>
    %57 = arith.subf %56, %54 : vector<16x1xf32>
    %58 = math.exp %57 : vector<16x1xf32>
    %59 = arith.mulf %55, %58 : vector<16x1xf32>
    %60 = vector.broadcast %54 : vector<16x1xf32> to vector<16x256xf32>
    %61 = arith.subf %43, %60 : vector<16x256xf32>
    %62 = math.exp %61 : vector<16x256xf32>
    %cst_44 = arith.constant dense<0.000000e+00> : vector<16xf32>
    %63 = vector.multi_reduction <add>, %62, %cst_44 [1] : vector<16x256xf32> to vector<16xf32>
    %64 = vector.shape_cast %63 : vector<16xf32> to vector<16x1xf32>
    %65 = arith.addf %59, %64 : vector<16x1xf32>
    %c0_45 = arith.constant 0 : index
    %c0_46 = arith.constant 0 : index
    %66 = vector.load %arg13[%c0_45, %c0_46] : memref<16x1xf32, #tpu.memory_space<vmem>>, vector<16x1xf32>
    tpu.vector_store %arg13[%c0_45, %c0_46], %65 {strides = array<i32>} : memref<16x1xf32, #tpu.memory_space<vmem>>, vector<16x1xf32>,
    %c0_47 = arith.constant 0 : index
    %c0_48 = arith.constant 0 : index
    %67 = vector.load %arg12[%c0_47, %c0_48] : memref<16x1xf32, #tpu.memory_space<vmem>>, vector<16x1xf32>
    tpu.vector_store %arg12[%c0_47, %c0_48], %54 {strides = array<i32>} : memref<16x1xf32, #tpu.memory_space<vmem>>, vector<16x1xf32>,
    %c0_i32_49 = arith.constant 0 : i32
    %68 = arith.cmpi eq, %arg1, %c0_i32_49 : i32
    %69 = arith.extui %68 : i1 to i32
    %c0_i32_50 = arith.constant 0 : i32
    %70 = arith.cmpi ne, %69, %c0_i32_50 : i32
    scf.if %70 {
      %c0_51 = arith.constant 0 : index
      %c0_52 = arith.constant 0 : index
      %71 = vector.load %arg11[%c0_51, %c0_52] : memref<16x1xf32, #tpu.memory_space<vmem>>, vector<16x1xf32>
      %c0_53 = arith.constant 0 : index
      %c0_54 = arith.constant 0 : index
      %72 = vector.load %arg9[%c0_53, %c0_54] : memref<16x1xf32, #tpu.memory_space<vmem>>, vector<16x1xf32>
      %c0_55 = arith.constant 0 : index
      %c0_56 = arith.constant 0 : index
      %73 = vector.load %arg10[%c0_55, %c0_56] : memref<16x1xf32, #tpu.memory_space<vmem>>, vector<16x1xf32>
      %74 = math.log %73 : vector<16x1xf32>
      %75 = arith.addf %72, %74 : vector<16x1xf32>
      %76 = arith.subf %71, %75 : vector<16x1xf32>
      %c0_57 = arith.constant 0 : index
      %c0_58 = arith.constant 0 : index
      %77 = vector.load %arg7[%c0_57, %c0_58] : memref<16x1xf32, #tpu.memory_space<vmem>>, vector<16x1xf32>
      tpu.vector_store %arg7[%c0_57, %c0_58], %76 {strides = array<i32>} : memref<16x1xf32, #tpu.memory_space<vmem>>, vector<16x1xf32>,
      %c0_59 = arith.constant 0 : index
      %c0_60 = arith.constant 0 : index
      %78 = vector.load %arg14[%c0_59, %c0_60] : memref<16x1xf32, #tpu.memory_space<vmem>>, vector<16x1xf32>
      %c0_61 = arith.constant 0 : index
      %c0_62 = arith.constant 0 : index
      %79 = vector.load %arg12[%c0_61, %c0_62] : memref<16x1xf32, #tpu.memory_space<vmem>>, vector<16x1xf32>
      %c0_63 = arith.constant 0 : index
      %c0_64 = arith.constant 0 : index
      %80 = vector.load %arg13[%c0_63, %c0_64] : memref<16x1xf32, #tpu.memory_space<vmem>>, vector<16x1xf32>
      %81 = math.log %80 : vector<16x1xf32>
      %82 = arith.addf %79, %81 : vector<16x1xf32>
      %83 = arith.subf %78, %82 : vector<16x1xf32>
      %c0_65 = arith.constant 0 : index
      %c0_66 = arith.constant 0 : index
      %84 = vector.load %arg8[%c0_65, %c0_66] : memref<16x1xf32, #tpu.memory_space<vmem>>, vector<16x1xf32>
      tpu.vector_store %arg8[%c0_65, %c0_66], %83 {strides = array<i32>} : memref<16x1xf32, #tpu.memory_space<vmem>>, vector<16x1xf32>,
    } else {
    }
    return
  }
  func.func @transform_0(%arg0: i32, %arg1: i32) -> (i32, i32) {
    %c0_i32 = arith.constant 0 : i32
    %c0_i32_0 = arith.constant 0 : i32
    return %arg0, %c0_i32 : i32, i32
  }
  func.func @transform_1(%arg0: i32, %arg1: i32) -> (i32, i32) {
    %c0_i32 = arith.constant 0 : i32
    %c0_i32_0 = arith.constant 0 : i32
    return %arg1, %c0_i32 : i32, i32
  }
  func.func @transform_2(%arg0: i32, %arg1: i32) -> (i32, i32) {
    %c0_i32 = arith.constant 0 : i32
    %c0_i32_0 = arith.constant 0 : i32
    return %arg0, %c0_i32 : i32, i32
  }
  func.func @transform_3(%arg0: i32, %arg1: i32) -> (i32, i32) {
    %c0_i32 = arith.constant 0 : i32
    %c0_i32_0 = arith.constant 0 : i32
    return %arg1, %c0_i32 : i32, i32
  }
  func.func @transform_4(%arg0: i32, %arg1: i32) -> (i32, i32) {
    %c0_i32 = arith.constant 0 : i32
    %c0_i32_0 = arith.constant 0 : i32
    return %arg0, %c0_i32 : i32, i32
  }
  func.func @transform_5(%arg0: i32, %arg1: i32) -> (i32, i32) {
    %c0_i32 = arith.constant 0 : i32
    %c0_i32_0 = arith.constant 0 : i32
    return %arg0, %c0_i32 : i32, i32
  }
  func.func @transform_6(%arg0: i32, %arg1: i32) -> (i32, i32) {
    %c0_i32 = arith.constant 0 : i32
    %c0_i32_0 = arith.constant 0 : i32
    return %arg0, %c0_i32 : i32, i32
  }
}

</mosaic_0001>

<llo_original>
// kernel: tpu_custom_call.1
$region0: #{tpu_custom_call.1}
  #allocation0 [shape = 'u32[]', space=smem, size = 0x4, offset = 0x4, fixed_abs, tag = 'smem constant byte address 0x4 - core index']
  #allocation1 [shape = 'u32[144,128]{1,0:T(1,128)}', space=vmem, size = 0x12000, scoped, tag = 'internal scratch']
  #allocation2 [shape = 'f32[16,1]{1,0:T(8,128)}', space=vmem, size = 0x2000, scoped, tag = 'scratch operand']
  #allocation3 [shape = 'f32[16,1]{1,0:T(8,128)}', space=vmem, size = 0x2000, scoped, tag = 'scratch operand']
  #allocation4 [shape = 'f32[16,1]{1,0:T(8,128)}', space=vmem, size = 0x2000, scoped, tag = 'scratch operand']
  #allocation5 [shape = 'f32[16,1]{1,0:T(8,128)}', space=vmem, size = 0x2000, scoped, tag = 'scratch operand']
  #allocation6 [shape = 'f32[16,1]{1,0:T(8,128)}', space=vmem, size = 0x2000, scoped, tag = 'scratch operand']
  #allocation7 [shape = 'f32[16,1]{1,0:T(8,128)}', space=vmem, size = 0x2000, scoped, tag = 'scratch operand']
  %s0 = inlined_call_operand.vmem [shape: f32[16,32], index: 0, kind: input, shape index: {}]
  %s1 = inlined_call_operand.vmem [shape: f32[256,32], index: 1, kind: input, shape index: {}]
  %s2 = inlined_call_operand.vmem [shape: f32[16,32], index: 2, kind: input, shape index: {}]
  %s3 = inlined_call_operand.vmem [shape: f32[256,32], index: 3, kind: input, shape index: {}]
  %s4 = inlined_call_operand.vmem [shape: s32[16,1], index: 4, kind: input, shape index: {}]
  %s5 = inlined_call_operand.vmem [shape: f32[16,1], index: 5, kind: output, shape index: {0}]
  %s6 = inlined_call_operand.vmem [shape: f32[16,1], index: 6, kind: output, shape index: {1}]
  %7 = xla_tuple %s5, %s6
  %s8 = sld [smem:[#allocation0]]
  $region50: #{tpu_custom_call.1} parent=0
    _
  %s10 = ssub.s32 1, %s8
  %s11 = scalar_select 0, %s10, %s8
  // Predicated region
  $region2: #{tpu_custom_call.1} parent=0 // pred_check
    _
  $region3: #{tpu_custom_call.1} parent=0 // pred_check_branch
    %13 = sbr.rel (0) target = $region5
  $region4: #{tpu_custom_call.1} parent=0 // pred_region
    _
  $region5: #{tpu_custom_call.1} parent=0 // pred_fallthru
    _
  // Predicated region
  $region6: #{tpu_custom_call.1} parent=0 // pred_check
    _
  $region7: #{tpu_custom_call.1} parent=0 // pred_check_branch
    %15 = sbr.rel (0) target = $region9
  $region8: #{tpu_custom_call.1} parent=0 // pred_region
    _
  $region9: #{tpu_custom_call.1} parent=0 // pred_fallthru
    _
  // Predicated region
  $region10: #{tpu_custom_call.1} parent=0 // pred_check
    _
  $region11: #{tpu_custom_call.1} parent=0 // pred_check_branch
    %17 = sbr.rel (0) target = $region13
  $region12: #{tpu_custom_call.1} parent=0 // pred_region
    _
  $region13: #{tpu_custom_call.1} parent=0 // pred_fallthru
    _
  // Predicated region
  $region14: #{tpu_custom_call.1} parent=0 // pred_check
    _
  $region15: #{tpu_custom_call.1} parent=0 // pred_check_branch
    %19 = sbr.rel (0) target = $region17
  $region16: #{tpu_custom_call.1} parent=0 // pred_region
    _
  $region17: #{tpu_custom_call.1} parent=0 // pred_fallthru
    _
  // Predicated region
  $region18: #{tpu_custom_call.1} parent=0 // pred_check
    _
  $region19: #{tpu_custom_call.1} parent=0 // pred_check_branch
    %21 = sbr.rel (0) target = $region21
  $region20: #{tpu_custom_call.1} parent=0 // pred_region
    _
  $region21: #{tpu_custom_call.1} parent=0 // pred_fallthru
    _
  %v22 = vlaneseq
  %v23 = vand.u32 %v22, 127
  %v24 = vadd.s32 %v23, 128
  %v25 = vld [vmem:[%s4] sm:$0xff]
  %v26 = vld [vmem:[%s4 + $0x8] sm:$0xff]
  %s27 = smul.u32 0, 256
  %v28 = vstv %s27
  %v29 = vsub.s32 %v25, %v28
  %v30 = vsub.s32 %v26, %v28
  %31 = vset.pattern.permute.xlu0 0
  %32 = vperm.xlu0 %31, %v29
  %v33 = vpop.permute.xlu0 %32
  %34 = vset.pattern.permute.xlu0 0
  %35 = vperm.xlu0 %34, %v30
  %v36 = vpop.permute.xlu0 %35
  %vm37 = vcmp.eq.s32.totalorder %v23, %v33
  %vm38 = vcmp.eq.s32.totalorder %v24, %v33
  %vm39 = vcmp.eq.s32.totalorder %v23, %v36
  %vm40 = vcmp.eq.s32.totalorder %v24, %v36
  %p41 = scmp.eq.s32.totalorder 0, 0
  // Predicated region
  $region22: #{tpu_custom_call.1} parent=0 // pred_check
    %p42 = pneg %p41
  $region23: #{tpu_custom_call.1} parent=0 // pred_check_branch
    %44 = sbr.rel (%p42) target = $region25
  $region24: #{tpu_custom_call.1} parent=0 // pred_region
    %vm45 = vcmask 7168
    %46 = vst.msk [vmem:[#allocation2] sm:$0xff] %vm45, -inf
    %47 = vst.msk [vmem:[#allocation2 + $0x8] sm:$0xff] %vm45, -inf
    %48 = vst.msk [vmem:[#allocation3] sm:$0xff] %vm45, 0.0
    %49 = vst.msk [vmem:[#allocation3 + $0x8] sm:$0xff] %vm45, 0.0
    %50 = vst.msk [vmem:[#allocation4] sm:$0xff] %vm45, 0.0
    %51 = vst.msk [vmem:[#allocation4 + $0x8] sm:$0xff] %vm45, 0.0
  $region25: #{tpu_custom_call.1} parent=0 // pred_fallthru
    _
  %v52 = vld [vmem:[%s0] sm:$0xff]
  %v53 = vld [vmem:[%s0 + $0x8] sm:$0xff]
  %v54 = vld [vmem:[%s1] sm:$0xff]
  %v55 = vld [vmem:[%s1 + $0x8] sm:$0xff]
  %v56 = vld [vmem:[%s1 + $0x10] sm:$0xff]
  %v57 = vld [vmem:[%s1 + $0x18] sm:$0xff]
  %v58 = vld [vmem:[%s1 + $0x20] sm:$0xff]
  %v59 = vld [vmem:[%s1 + $0x28] sm:$0xff]
  %v60 = vld [vmem:[%s1 + $0x30] sm:$0xff]
  %v61 = vld [vmem:[%s1 + $0x38] sm:$0xff]
  %v62 = vld [vmem:[%s1 + $0x40] sm:$0xff]
  %v63 = vld [vmem:[%s1 + $0x48] sm:$0xff]
  %v64 = vld [vmem:[%s1 + $0x50] sm:$0xff]
  %v65 = vld [vmem:[%s1 + $0x58] sm:$0xff]
  %v66 = vld [vmem:[%s1 + $0x60] sm:$0xff]
  %v67 = vld [vmem:[%s1 + $0x68] sm:$0xff]
  %v68 = vld [vmem:[%s1 + $0x70] sm:$0xff]
  %v69 = vld [vmem:[%s1 + $0x78] sm:$0xff]
  %v70 = vld [vmem:[%s1 + $0x80] sm:$0xff]
  %v71 = vld [vmem:[%s1 + $0x88] sm:$0xff]
  %v72 = vld [vmem:[%s1 + $0x90] sm:$0xff]
  %v73 = vld [vmem:[%s1 + $0x98] sm:$0xff]
  %v74 = vld [vmem:[%s1 + $0xa0] sm:$0xff]
  %v75 = vld [vmem:[%s1 + $0xa8] sm:$0xff]
  %v76 = vld [vmem:[%s1 + $0xb0] sm:$0xff]
  %v77 = vld [vmem:[%s1 + $0xb8] sm:$0xff]
  %v78 = vld [vmem:[%s1 + $0xc0] sm:$0xff]
  %v79 = vld [vmem:[%s1 + $0xc8] sm:$0xff]
  %v80 = vld [vmem:[%s1 + $0xd0] sm:$0xff]
  %v81 = vld [vmem:[%s1 + $0xd8] sm:$0xff]
  %v82 = vld [vmem:[%s1 + $0xe0] sm:$0xff]
  %v83 = vld [vmem:[%s1 + $0xe8] sm:$0xff]
  %v84 = vld [vmem:[%s1 + $0xf0] sm:$0xff]
  %v85 = vld [vmem:[%s1 + $0xf8] sm:$0xff]
  %vm86 = vcmask 261120
  %v88 = vsel %vm86, %v52, 0
  %v91 = vsel %vm86, %v53, 0
  %v94 = vsel %vm86, %v54, 0
  %v97 = vsel %vm86, %v55, 0
  %v100 = vsel %vm86, %v56, 0
  %v103 = vsel %vm86, %v57, 0
  %v106 = vsel %vm86, %v58, 0
  %v109 = vsel %vm86, %v59, 0
  %v112 = vsel %vm86, %v60, 0
  %v115 = vsel %vm86, %v61, 0
  %v118 = vsel %vm86, %v62, 0
  %v121 = vsel %vm86, %v63, 0
  %v124 = vsel %vm86, %v64, 0
  %v127 = vsel %vm86, %v65, 0
  %v130 = vsel %vm86, %v66, 0
  %v133 = vsel %vm86, %v67, 0
  %v136 = vsel %vm86, %v68, 0
  %v139 = vsel %vm86, %v69, 0
  %v142 = vsel %vm86, %v70, 0
  %v145 = vsel %vm86, %v71, 0
  %v148 = vsel %vm86, %v72, 0
  %v151 = vsel %vm86, %v73, 0
  %v154 = vsel %vm86, %v74, 0
  %v157 = vsel %vm86, %v75, 0
  %v160 = vsel %vm86, %v76, 0
  %v163 = vsel %vm86, %v77, 0
  %v166 = vsel %vm86, %v78, 0
  %v169 = vsel %vm86, %v79, 0
  %v172 = vsel %vm86, %v80, 0
  %v175 = vsel %vm86, %v81, 0
  %v178 = vsel %vm86, %v82, 0
  %v181 = vsel %vm86, %v83, 0
  %v184 = vsel %vm86, %v84, 0
  %v187 = vsel %vm86, %v85, 0
  %189 = vmatprep.subr.mxu0 0.0
  %190 = vmatpush1.xpose.msra.mxu0 %v94
  %191 = vmatprep.subr.mxu0 0.0
  %192 = vmatpush1.xpose.msra.mxu0 %v97
  %193 = vmatprep.subr.mxu0 0.0
  %194 = vmatpush1.xpose.msra.mxu0 %v100
  %195 = vmatprep.subr.mxu0 0.0
  %196 = vmatpush1.xpose.msra.mxu0 %v103
  %197 = vmatprep.subr.mxu0 0.0
  %198 = vmatpush1.xpose.msra.mxu0 %v106
  %199 = vmatprep.subr.mxu0 0.0
  %200 = vmatpush1.xpose.msra.mxu0 %v109
  %201 = vmatprep.subr.mxu0 0.0
  %202 = vmatpush1.xpose.msra.mxu0 %v112
  %203 = vmatprep.subr.mxu0 0.0
  %204 = vmatpush1.xpose.msra.mxu0 %v115
  %205 = vmatprep.subr.mxu0 0.0
  %206 = vmatpush1.xpose.msra.mxu0 %v118
  %207 = vmatprep.subr.mxu0 0.0
  %208 = vmatpush1.xpose.msra.mxu0 %v121
  %209 = vmatprep.subr.mxu0 0.0
  %210 = vmatpush1.xpose.msra.mxu0 %v124
  %211 = vmatprep.subr.mxu0 0.0
  %212 = vmatpush1.xpose.msra.mxu0 %v127
  %213 = vmatprep.subr.mxu0 0.0
  %214 = vmatpush1.xpose.msra.mxu0 %v130
  %215 = vmatprep.subr.mxu0 0.0
  %216 = vmatpush1.xpose.msra.mxu0 %v133
  %217 = vmatprep.subr.mxu0 0.0
  %218 = vmatpush1.xpose.msra.mxu0 %v136
  %219 = vmatprep.subr.mxu0 0.0
  %220 = vmatpush1.xpose.msra.mxu0 %v139
  %221 = vmatprep.subr.mxu0 0.0
  %222 = vmatpush1.xpose.msra.mxu0 %v142
  %223 = vmatprep.subr.mxu0 0.0
  %224 = vmatpush1.xpose.msra.mxu0 %v145
  %225 = vmatprep.subr.mxu0 0.0
  %226 = vmatpush1.xpose.msra.mxu0 %v148
  %227 = vmatprep.subr.mxu0 0.0
  %228 = vmatpush1.xpose.msra.mxu0 %v151
  %229 = vmatprep.subr.mxu0 0.0
  %230 = vmatpush1.xpose.msra.mxu0 %v154
  %231 = vmatprep.subr.mxu0 0.0
  %232 = vmatpush1.xpose.msra.mxu0 %v157
  %233 = vmatprep.subr.mxu0 0.0
  %234 = vmatpush1.xpose.msra.mxu0 %v160
  %235 = vmatprep.subr.mxu0 0.0
  %236 = vmatpush1.xpose.msra.mxu0 %v163
  %237 = vmatprep.subr.mxu0 0.0
  %238 = vmatpush1.xpose.msra.mxu0 %v166
  %239 = vmatprep.subr.mxu0 0.0
  %240 = vmatpush1.xpose.msra.mxu0 %v169
  %241 = vmatprep.subr.mxu0 0.0
  %242 = vmatpush1.xpose.msra.mxu0 %v172
  %243 = vmatprep.subr.mxu0 0.0
  %244 = vmatpush1.xpose.msra.mxu0 %v175
  %245 = vmatprep.subr.mxu0 0.0
  %246 = vmatpush1.xpose.msra.mxu0 %v178
  %247 = vmatprep.subr.mxu0 0.0
  %248 = vmatpush1.xpose.msra.mxu0 %v181
  %249 = vmatprep.subr.mxu0 0.0
  %250 = vmatpush1.xpose.msra.mxu0 %v184
  %251 = vmatprep.subr.mxu0 0.0
  %252 = vmatpush1.xpose.msra.mxu0 %v187
  %253 = vmatprep.mubr.f32.mxu0 0.0
  %254 = vmatmul.mubr.f32.gmra.mrb[0].mxu0 %v88
  %v255 = vpop.f32.mrb[0].mxu0
  %v256 = vadd.f32 0.0, %v255
  %v257 = vpop.f32.mrb[0].mxu0
  %v258 = vadd.f32 0.0, %v257
  %259 = vmatprep.mubr.f32.mxu0 0.0
  %260 = vmatmul.mubr.f32.gmra.mrb[0].mxu0 %v91
  %v261 = vpop.f32.mrb[0].mxu0
  %v262 = vadd.f32 0.0, %v261
  %v263 = vpop.f32.mrb[0].mxu0
  %v264 = vadd.f32 0.0, %v263
  %265 = vdwg.mxu0
  %v266 = vld [vmem:[#allocation4] sm:$0xff]
  %v267 = vld [vmem:[#allocation4 + $0x8] sm:$0xff]
  %v268 = vsel %vm37, %v256, 0.0
  %v269 = vsel %vm38, %v258, 0.0
  %v270 = vsel %vm39, %v262, 0.0
  %v271 = vsel %vm40, %v264, 0.0
  %v272 = vadd.f32 %v268, %v269
  %273 = vadd.xlane.f32.xlu0 %v272
  %v274 = vpop.xlane.xlu0 %273
  %v275 = vadd.f32 %v270, %v271
  %276 = vadd.xlane.f32.xlu0 %v275
  %v277 = vpop.xlane.xlu0 %276
  %v278 = vadd.f32 %v266, %v274
  %v279 = vadd.f32 %v267, %v277
  %vm280 = vcmask 7168
  %281 = vst.msk [vmem:[#allocation4] sm:$0xff] %vm280, %v278
  %282 = vst.msk [vmem:[#allocation4 + $0x8] sm:$0xff] %vm280, %v279
  %v283 = vld [vmem:[#allocation2] sm:$0xff]
  %v284 = vld [vmem:[#allocation2 + $0x8] sm:$0xff]
  %v285 = vmax.f32 %v256, %v258
  %286 = vmax.xlane.f32.xlu0 %v285
  %v287 = vpop.xlane.xlu0 %286
  %v288 = vmax.f32 %v262, %v264
  %289 = vmax.xlane.f32.xlu0 %v288
  %v290 = vpop.xlane.xlu0 %289
  %v291 = vmax.f32 %v283, %v287
  %v292 = vmax.f32 %v284, %v290
  %v293 = vld [vmem:[#allocation3] sm:$0xff]
  %v294 = vld [vmem:[#allocation3 + $0x8] sm:$0xff]
  %v295 = vsub.f32 %v283, %v291
  %v296 = vsub.f32 %v284, %v292
  %v297 = vmul.f32 %v295, 1.442695
  %v298 = vpow.pop %v297
  %v299 = vmul.f32 %v296, 1.442695
  %v300 = vpow.pop %v299
  %v301 = vmul.f32 %v293, %v298
  %v302 = vmul.f32 %v294, %v300
  %304 = vset.pattern.permute.xlu0 0
  %305 = vperm.xlu0 %304, %v291
  %v306 = vpop.permute.xlu0 %305
  %309 = vset.pattern.permute.xlu0 0
  %310 = vperm.xlu0 %309, %v292
  %v311 = vpop.permute.xlu0 %310
  %v313 = vsub.f32 %v256, %v306
  %v314 = vsub.f32 %v258, %v306
  %v315 = vsub.f32 %v262, %v311
  %v316 = vsub.f32 %v264, %v311
  %v317 = vmul.f32 %v313, 1.442695
  %v318 = vpow.pop %v317
  %v319 = vmul.f32 %v314, 1.442695
  %v320 = vpow.pop %v319
  %v321 = vmul.f32 %v315, 1.442695
  %v322 = vpow.pop %v321
  %v323 = vmul.f32 %v316, 1.442695
  %v324 = vpow.pop %v323
  %v325 = vadd.f32 %v318, %v320
  %326 = vadd.xlane.f32.xlu0 %v325
  %v327 = vpop.xlane.xlu0 %326
  %v328 = vadd.f32 %v322, %v324
  %329 = vadd.xlane.f32.xlu0 %v328
  %v330 = vpop.xlane.xlu0 %329
  %v331 = vadd.f32 %v301, %v327
  %v332 = vadd.f32 %v302, %v330
  %333 = vst.msk [vmem:[#allocation3] sm:$0xff] %vm280, %v331
  %334 = vst.msk [vmem:[#allocation3 + $0x8] sm:$0xff] %vm280, %v332
  %335 = vst.msk [vmem:[#allocation2] sm:$0xff] %vm280, %v291
  %336 = vst.msk [vmem:[#allocation2 + $0x8] sm:$0xff] %vm280, %v292
  // Predicated region
  $region26: #{tpu_custom_call.1} parent=0 // pred_check
    %p337 = pneg %p41
  $region27: #{tpu_custom_call.1} parent=0 // pred_check_branch
    %339 = sbr.rel (%p337) target = $region29
  $region28: #{tpu_custom_call.1} parent=0 // pred_region
    %340 = vst.msk [vmem:[#allocation5] sm:$0xff] %vm280, -inf
    %341 = vst.msk [vmem:[#allocation5 + $0x8] sm:$0xff] %vm280, -inf
    %342 = vst.msk [vmem:[#allocation6] sm:$0xff] %vm280, 0.0
    %343 = vst.msk [vmem:[#allocation6 + $0x8] sm:$0xff] %vm280, 0.0
    %344 = vst.msk [vmem:[#allocation7] sm:$0xff] %vm280, 0.0
    %345 = vst.msk [vmem:[#allocation7 + $0x8] sm:$0xff] %vm280, 0.0
  $region29: #{tpu_custom_call.1} parent=0 // pred_fallthru
    _
  %v346 = vld [vmem:[%s2] sm:$0xff]
  %v347 = vld [vmem:[%s2 + $0x8] sm:$0xff]
  %v348 = vld [vmem:[%s3] sm:$0xff]
  %v349 = vld [vmem:[%s3 + $0x8] sm:$0xff]
  %v350 = vld [vmem:[%s3 + $0x10] sm:$0xff]
  %v351 = vld [vmem:[%s3 + $0x18] sm:$0xff]
  %v352 = vld [vmem:[%s3 + $0x20] sm:$0xff]
  %v353 = vld [vmem:[%s3 + $0x28] sm:$0xff]
  %v354 = vld [vmem:[%s3 + $0x30] sm:$0xff]
  %v355 = vld [vmem:[%s3 + $0x38] sm:$0xff]
  %v356 = vld [vmem:[%s3 + $0x40] sm:$0xff]
  %v357 = vld [vmem:[%s3 + $0x48] sm:$0xff]
  %v358 = vld [vmem:[%s3 + $0x50] sm:$0xff]
  %v359 = vld [vmem:[%s3 + $0x58] sm:$0xff]
  %v360 = vld [vmem:[%s3 + $0x60] sm:$0xff]
  %v361 = vld [vmem:[%s3 + $0x68] sm:$0xff]
  %v362 = vld [vmem:[%s3 + $0x70] sm:$0xff]
  %v363 = vld [vmem:[%s3 + $0x78] sm:$0xff]
  %v364 = vld [vmem:[%s3 + $0x80] sm:$0xff]
  %v365 = vld [vmem:[%s3 + $0x88] sm:$0xff]
  %v366 = vld [vmem:[%s3 + $0x90] sm:$0xff]
  %v367 = vld [vmem:[%s3 + $0x98] sm:$0xff]
  %v368 = vld [vmem:[%s3 + $0xa0] sm:$0xff]
  %v369 = vld [vmem:[%s3 + $0xa8] sm:$0xff]
  %v370 = vld [vmem:[%s3 + $0xb0] sm:$0xff]
  %v371 = vld [vmem:[%s3 + $0xb8] sm:$0xff]
  %v372 = vld [vmem:[%s3 + $0xc0] sm:$0xff]
  %v373 = vld [vmem:[%s3 + $0xc8] sm:$0xff]
  %v374 = vld [vmem:[%s3 + $0xd0] sm:$0xff]
  %v375 = vld [vmem:[%s3 + $0xd8] sm:$0xff]
  %v376 = vld [vmem:[%s3 + $0xe0] sm:$0xff]
  %v377 = vld [vmem:[%s3 + $0xe8] sm:$0xff]
  %v378 = vld [vmem:[%s3 + $0xf0] sm:$0xff]
  %v379 = vld [vmem:[%s3 + $0xf8] sm:$0xff]
  %v381 = vsel %vm86, %v346, 0
  %v384 = vsel %vm86, %v347, 0
  %v387 = vsel %vm86, %v348, 0
  %v390 = vsel %vm86, %v349, 0
  %v393 = vsel %vm86, %v350, 0
  %v396 = vsel %vm86, %v351, 0
  %v399 = vsel %vm86, %v352, 0
  %v402 = vsel %vm86, %v353, 0
  %v405 = vsel %vm86, %v354, 0
  %v408 = vsel %vm86, %v355, 0
  %v411 = vsel %vm86, %v356, 0
  %v414 = vsel %vm86, %v357, 0
  %v417 = vsel %vm86, %v358, 0
  %v420 = vsel %vm86, %v359, 0
  %v423 = vsel %vm86, %v360, 0
  %v426 = vsel %vm86, %v361, 0
  %v429 = vsel %vm86, %v362, 0
  %v432 = vsel %vm86, %v363, 0
  %v435 = vsel %vm86, %v364, 0
  %v438 = vsel %vm86, %v365, 0
  %v441 = vsel %vm86, %v366, 0
  %v444 = vsel %vm86, %v367, 0
  %v447 = vsel %vm86, %v368, 0
  %v450 = vsel %vm86, %v369, 0
  %v453 = vsel %vm86, %v370, 0
  %v456 = vsel %vm86, %v371, 0
  %v459 = vsel %vm86, %v372, 0
  %v462 = vsel %vm86, %v373, 0
  %v465 = vsel %vm86, %v374, 0
  %v468 = vsel %vm86, %v375, 0
  %v471 = vsel %vm86, %v376, 0
  %v474 = vsel %vm86, %v377, 0
  %v477 = vsel %vm86, %v378, 0
  %v480 = vsel %vm86, %v379, 0
  %482 = vmatprep.subr.mxu0 0.0
  %483 = vmatpush1.xpose.msra.mxu0 %v387
  %484 = vmatprep.subr.mxu0 0.0
  %485 = vmatpush1.xpose.msra.mxu0 %v390
  %486 = vmatprep.subr.mxu0 0.0
  %487 = vmatpush1.xpose.msra.mxu0 %v393
  %488 = vmatprep.subr.mxu0 0.0
  %489 = vmatpush1.xpose.msra.mxu0 %v396
  %490 = vmatprep.subr.mxu0 0.0
  %491 = vmatpush1.xpose.msra.mxu0 %v399
  %492 = vmatprep.subr.mxu0 0.0
  %493 = vmatpush1.xpose.msra.mxu0 %v402
  %494 = vmatprep.subr.mxu0 0.0
  %495 = vmatpush1.xpose.msra.mxu0 %v405
  %496 = vmatprep.subr.mxu0 0.0
  %497 = vmatpush1.xpose.msra.mxu0 %v408
  %498 = vmatprep.subr.mxu0 0.0
  %499 = vmatpush1.xpose.msra.mxu0 %v411
  %500 = vmatprep.subr.mxu0 0.0
  %501 = vmatpush1.xpose.msra.mxu0 %v414
  %502 = vmatprep.subr.mxu0 0.0
  %503 = vmatpush1.xpose.msra.mxu0 %v417
  %504 = vmatprep.subr.mxu0 0.0
  %505 = vmatpush1.xpose.msra.mxu0 %v420
  %506 = vmatprep.subr.mxu0 0.0
  %507 = vmatpush1.xpose.msra.mxu0 %v423
  %508 = vmatprep.subr.mxu0 0.0
  %509 = vmatpush1.xpose.msra.mxu0 %v426
  %510 = vmatprep.subr.mxu0 0.0
  %511 = vmatpush1.xpose.msra.mxu0 %v429
  %512 = vmatprep.subr.mxu0 0.0
  %513 = vmatpush1.xpose.msra.mxu0 %v432
  %514 = vmatprep.subr.mxu0 0.0
  %515 = vmatpush1.xpose.msra.mxu0 %v435
  %516 = vmatprep.subr.mxu0 0.0
  %517 = vmatpush1.xpose.msra.mxu0 %v438
  %518 = vmatprep.subr.mxu0 0.0
  %519 = vmatpush1.xpose.msra.mxu0 %v441
  %520 = vmatprep.subr.mxu0 0.0
  %521 = vmatpush1.xpose.msra.mxu0 %v444
  %522 = vmatprep.subr.mxu0 0.0
  %523 = vmatpush1.xpose.msra.mxu0 %v447
  %524 = vmatprep.subr.mxu0 0.0
  %525 = vmatpush1.xpose.msra.mxu0 %v450
  %526 = vmatprep.subr.mxu0 0.0
  %527 = vmatpush1.xpose.msra.mxu0 %v453
  %528 = vmatprep.subr.mxu0 0.0
  %529 = vmatpush1.xpose.msra.mxu0 %v456
  %530 = vmatprep.subr.mxu0 0.0
  %531 = vmatpush1.xpose.msra.mxu0 %v459
  %532 = vmatprep.subr.mxu0 0.0
  %533 = vmatpush1.xpose.msra.mxu0 %v462
  %534 = vmatprep.subr.mxu0 0.0
  %535 = vmatpush1.xpose.msra.mxu0 %v465
  %536 = vmatprep.subr.mxu0 0.0
  %537 = vmatpush1.xpose.msra.mxu0 %v468
  %538 = vmatprep.subr.mxu0 0.0
  %539 = vmatpush1.xpose.msra.mxu0 %v471
  %540 = vmatprep.subr.mxu0 0.0
  %541 = vmatpush1.xpose.msra.mxu0 %v474
  %542 = vmatprep.subr.mxu0 0.0
  %543 = vmatpush1.xpose.msra.mxu0 %v477
  %544 = vmatprep.subr.mxu0 0.0
  %545 = vmatpush1.xpose.msra.mxu0 %v480
  %546 = vmatprep.mubr.f32.mxu0 0.0
  %547 = vmatmul.mubr.f32.gmra.mrb[0].mxu0 %v381
  %v548 = vpop.f32.mrb[0].mxu0
  %v549 = vadd.f32 0.0, %v548
  %v550 = vpop.f32.mrb[0].mxu0
  %v551 = vadd.f32 0.0, %v550
  %552 = vmatprep.mubr.f32.mxu0 0.0
  %553 = vmatmul.mubr.f32.gmra.mrb[0].mxu0 %v384
  %v554 = vpop.f32.mrb[0].mxu0
  %v555 = vadd.f32 0.0, %v554
  %v556 = vpop.f32.mrb[0].mxu0
  %v557 = vadd.f32 0.0, %v556
  %558 = vdwg.mxu0
  %v559 = vld [vmem:[#allocation7] sm:$0xff]
  %v560 = vld [vmem:[#allocation7 + $0x8] sm:$0xff]
  %v561 = vsel %vm37, %v549, 0.0
  %v562 = vsel %vm38, %v551, 0.0
  %v563 = vsel %vm39, %v555, 0.0
  %v564 = vsel %vm40, %v557, 0.0
  %v565 = vadd.f32 %v561, %v562
  %566 = vadd.xlane.f32.xlu0 %v565
  %v567 = vpop.xlane.xlu0 %566
  %v568 = vadd.f32 %v563, %v564
  %569 = vadd.xlane.f32.xlu0 %v568
  %v570 = vpop.xlane.xlu0 %569
  %v571 = vadd.f32 %v559, %v567
  %v572 = vadd.f32 %v560, %v570
  %573 = vst.msk [vmem:[#allocation7] sm:$0xff] %vm280, %v571
  %574 = vst.msk [vmem:[#allocation7 + $0x8] sm:$0xff] %vm280, %v572
  %v575 = vld [vmem:[#allocation5] sm:$0xff]
  %v576 = vld [vmem:[#allocation5 + $0x8] sm:$0xff]
  %v577 = vmax.f32 %v549, %v551
  %578 = vmax.xlane.f32.xlu0 %v577
  %v579 = vpop.xlane.xlu0 %578
  %v580 = vmax.f32 %v555, %v557
  %581 = vmax.xlane.f32.xlu0 %v580
  %v582 = vpop.xlane.xlu0 %581
  %v583 = vmax.f32 %v575, %v579
  %v584 = vmax.f32 %v576, %v582
  %v585 = vld [vmem:[#allocation6] sm:$0xff]
  %v586 = vld [vmem:[#allocation6 + $0x8] sm:$0xff]
  %v587 = vsub.f32 %v575, %v583
  %v588 = vsub.f32 %v576, %v584
  %v589 = vmul.f32 %v587, 1.442695
  %v590 = vpow.pop %v589
  %v591 = vmul.f32 %v588, 1.442695
  %v592 = vpow.pop %v591
  %v593 = vmul.f32 %v585, %v590
  %v594 = vmul.f32 %v586, %v592
  %596 = vset.pattern.permute.xlu0 0
  %597 = vperm.xlu0 %596, %v583
  %v598 = vpop.permute.xlu0 %597
  %601 = vset.pattern.permute.xlu0 0
  %602 = vperm.xlu0 %601, %v584
  %v603 = vpop.permute.xlu0 %602
  %v605 = vsub.f32 %v549, %v598
  %v606 = vsub.f32 %v551, %v598
  %v607 = vsub.f32 %v555, %v603
  %v608 = vsub.f32 %v557, %v603
  %v609 = vmul.f32 %v605, 1.442695
  %v610 = vpow.pop %v609
  %v611 = vmul.f32 %v606, 1.442695
  %v612 = vpow.pop %v611
  %v613 = vmul.f32 %v607, 1.442695
  %v614 = vpow.pop %v613
  %v615 = vmul.f32 %v608, 1.442695
  %v616 = vpow.pop %v615
  %v617 = vadd.f32 %v610, %v612
  %618 = vadd.xlane.f32.xlu0 %v617
  %v619 = vpop.xlane.xlu0 %618
  %v620 = vadd.f32 %v614, %v616
  %621 = vadd.xlane.f32.xlu0 %v620
  %v622 = vpop.xlane.xlu0 %621
  %v623 = vadd.f32 %v593, %v619
  %v624 = vadd.f32 %v594, %v622
  %625 = vst.msk [vmem:[#allocation6] sm:$0xff] %vm280, %v623
  %626 = vst.msk [vmem:[#allocation6 + $0x8] sm:$0xff] %vm280, %v624
  %627 = vst.msk [vmem:[#allocation5] sm:$0xff] %vm280, %v583
  %628 = vst.msk [vmem:[#allocation5 + $0x8] sm:$0xff] %vm280, %v584
  // Predicated region
  $region30: #{tpu_custom_call.1} parent=0 // pred_check
    %p629 = pneg %p41
  $region31: #{tpu_custom_call.1} parent=0 // pred_check_branch
    %631 = sbr.rel (%p629) target = $region33
  $region32: #{tpu_custom_call.1} parent=0 // pred_region
    %v632 = vld [vmem:[#allocation4] sm:$0xff]
    %v633 = vld [vmem:[#allocation4 + $0x8] sm:$0xff]
    %v634 = vld [vmem:[#allocation2] sm:$0xff]
    %v635 = vld [vmem:[#allocation2 + $0x8] sm:$0xff]
    %v636 = vld [vmem:[#allocation3] sm:$0xff]
    %v637 = vld [vmem:[#allocation3 + $0x8] sm:$0xff]
    %v638 = vlog2.pop %v636
    %v639 = vmul.f32 %v638, 0.6931472
    %v640 = vlog2.pop %v637
    %v641 = vmul.f32 %v640, 0.6931472
    %v642 = vadd.f32 %v634, %v639
    %v643 = vadd.f32 %v635, %v641
    %v644 = vsub.f32 %v632, %v642
    %v645 = vsub.f32 %v633, %v643
    %646 = vst.msk [vmem:[%s5] sm:$0xff] %vm280, %v644
    %647 = vst.msk [vmem:[%s5 + $0x8] sm:$0xff] %vm280, %v645
    %v648 = vld [vmem:[#allocation7] sm:$0xff]
    %v649 = vld [vmem:[#allocation7 + $0x8] sm:$0xff]
    %v650 = vld [vmem:[#allocation5] sm:$0xff]
    %v651 = vld [vmem:[#allocation5 + $0x8] sm:$0xff]
    %v652 = vld [vmem:[#allocation6] sm:$0xff]
    %v653 = vld [vmem:[#allocation6 + $0x8] sm:$0xff]
    %v654 = vlog2.pop %v652
    %v655 = vmul.f32 %v654, 0.6931472
    %v656 = vlog2.pop %v653
    %v657 = vmul.f32 %v656, 0.6931472
    %v658 = vadd.f32 %v650, %v655
    %v659 = vadd.f32 %v651, %v657
    %v660 = vsub.f32 %v648, %v658
    %v661 = vsub.f32 %v649, %v659
    %662 = vst.msk [vmem:[%s6] sm:$0xff] %vm280, %v660
    %663 = vst.msk [vmem:[%s6 + $0x8] sm:$0xff] %vm280, %v661
  $region33: #{tpu_custom_call.1} parent=0 // pred_fallthru
    _
  // Predicated region
  $region34: #{tpu_custom_call.1} parent=0 // pred_check
    _
  $region35: #{tpu_custom_call.1} parent=0 // pred_check_branch
    %665 = sbr.rel (0) target = $region37
  $region36: #{tpu_custom_call.1} parent=0 // pred_region
    _
  $region37: #{tpu_custom_call.1} parent=0 // pred_fallthru
    _
  // Predicated region
  $region38: #{tpu_custom_call.1} parent=0 // pred_check
    _
  $region39: #{tpu_custom_call.1} parent=0 // pred_check_branch
    %667 = sbr.rel (0) target = $region41
  $region40: #{tpu_custom_call.1} parent=0 // pred_region
    _
  $region41: #{tpu_custom_call.1} parent=0 // pred_fallthru
    _
  // Predicated region
  $region42: #{tpu_custom_call.1} parent=0 // pred_check
    _
  $region43: #{tpu_custom_call.1} parent=0 // pred_check_branch
    %669 = sbr.rel (0) target = $region45
  $region44: #{tpu_custom_call.1} parent=0 // pred_region
    _
  $region45: #{tpu_custom_call.1} parent=0 // pred_fallthru
    _
  // Predicated region
  $region46: #{tpu_custom_call.1} parent=0 // pred_check
    _
  $region47: #{tpu_custom_call.1} parent=0 // pred_check_branch
    %671 = sbr.rel (0) target = $region49
  $region48: #{tpu_custom_call.1} parent=0 // pred_region
    _
  $region49: #{tpu_custom_call.1} parent=0 // pred_fallthru
    _

</llo_original>
